<compile_context>
chip_gen: v5e
topology: v5e:2x2
jax: 0.10.0
libtpu: 0.0.40
codegen_flags: <defaults>
</compile_context>

<pallas_src>
import math

import numpy as np
import jax
import jax.numpy as jnp
from jax.experimental import pallas as pl
from jax.experimental.pallas import tpu as pltpu

EPS = 1e-10
ALPHA = 0.649                 # luminance masking exponent
W_CM = 0.7                    # contrast masking weight = sigmoid(log(.7/.3))
BETA = 4.0                    # pooling exponent (integer 4 -> square of square)

# JPEG quantization matrix used by WatsonDistance.__init__ for blocksize == 8
JPEG_QM = [
    [1.40, 1.01, 1.16, 1.66, 2.40, 3.43, 4.79, 6.56],
    [1.01, 1.45, 1.32, 1.52, 2.00, 2.71, 3.67, 4.93],
    [1.16, 1.32, 2.24, 2.59, 2.98, 3.64, 4.60, 5.88],
    [1.66, 1.52, 2.59, 3.77, 4.55, 5.30, 6.28, 7.60],
    [2.40, 2.00, 2.98, 4.55, 6.15, 7.46, 8.71, 10.17],
    [3.43, 2.71, 3.64, 5.30, 7.46, 9.62, 11.58, 13.51],
    [4.79, 3.67, 4.60, 6.28, 8.71, 11.58, 14.50, 17.29],
    [6.56, 4.93, 5.88, 7.60, 10.17, 13.51, 17.29, 21.15],
]

RGB2YCBCR = [[0.299, 0.587, 0.114, 0.0],
             [-0.1687, -0.3313, 0.5, 0.5],
             [0.5, -0.4187, -0.0813, 0.5]]


def dct_matrix(B: int) -> jnp.ndarray:
    n = jnp.arange(B, dtype=jnp.float32)[None, :]
    i = jnp.arange(B, dtype=jnp.float32)[:, None]
    c = jnp.where(jnp.arange(B) == 0,
                  1.0 / math.sqrt(B),
                  math.sqrt(2.0 / B)).astype(jnp.float32)[:, None]
    return c * jnp.cos((2.0 * n + 1.0) / (2.0 * B) * i * math.pi)


def watson_kernel(logavg_ref, x_ref, y_ref, d_ref, t_ref, tp_ref, out_ref):
    """Grid = (K-tile, channel).  x/y refs hold (1, 64, TK) bf16 blocks of the
    already-YCbCr-converted images; out gets per-block sums of dist^beta."""
    c = pl.program_id(1)
    log_avg = logavg_ref[c]                    # log(avg_lum + EPS), channel c

    D = d_ref[...]                             # (64, 64) bf16, A (x) A

    # 2-D block DCT for every block at once (bf16 MXU, f32 accumulation)
    c1 = jnp.dot(D, x_ref[0], preferred_element_type=jnp.float32)   # dct(input)
    c0 = jnp.dot(D, y_ref[0], preferred_element_type=jnp.float32)   # dct(target)

    # derive everything needed from c0/c1 early so they die quickly
    diff = jnp.abs(c0 - c1)                    # (64, TK) f32
    dc = c0[0:1, :]                            # (1, TK) per-block DC coeff
    absc0 = jnp.abs(c0) + EPS                  # (64, TK)

    # luminance masking (f32 logs/exps: EPS-sized values)
    log_ratio = jnp.log(dc + EPS) - log_avg    # (1, TK)
    lum = jnp.exp(ALPHA * log_ratio)           # (1, TK)
    t_l = t_ref[...] * lum                     # (64, TK)

    # contrast masking:
    #   cm = (|c0|+eps)^w * t_l^(1-w)
    #      = t^(1-w) * exp(w*log(|c0|+eps) + (1-w)*alpha*log_ratio)
    cm = tp_ref[...] * jnp.exp(W_CM * jnp.log(absc0)
                               + ((1.0 - W_CM) * ALPHA) * log_ratio)

    # smooth max of (t_l, cm) with a single exp
    mx = jnp.maximum(t_l, cm)
    mn = jnp.minimum(t_l, cm)
    e = jnp.exp(mn - mx)
    s = (mx + mn * e) * pl.reciprocal(1.0 + e, approx=True)

    # pooling term (|diff/s| + eps)^4, summed over the 64 frequencies
    d = diff * pl.reciprocal(s, approx=True) + EPS
    d2 = d * d
    out_ref[0] = jnp.sum(d2 * d2, axis=0, keepdims=True)          # (1, TK)


def _choose_tiles(K: int, max_tile: int = 4096):
    """Pick (TK, K_padded): TK a multiple of 128, <= max_tile, padding small.
    max_tile=4096 keeps double-buffering + f32 temps well inside v7x VMEM."""
    k128 = ((K + 127) // 128) * 128
    nt = max(1, -(-k128 // max_tile))          # number of K tiles
    tk = -(-k128 // nt)
    tk = ((tk + 127) // 128) * 128
    return tk, tk * nt


def watson_loss(x, y, blocksize=8, max_tile=4096):
    """x, y: (N, 3, H, W) float32 in [-1, 1], NCHW like PyTorch. Returns (N,)."""
    N, C, H, W = x.shape
    assert C == 3 and H % blocksize == 0 and W % blocksize == 0
    B = blocksize
    HB, WB = H // B, W // B
    KB = HB * WB                       # blocks per sample
    K = N * KB                         # total blocks

    # ---- wrapper-side prologue: (x+1)/2 and RGB -> YCbCr (done once) ----
    T = jnp.asarray(RGB2YCBCR, jnp.float32)
    M3, bias = T[:, :3], T[:, 3]
    xx = (x.astype(jnp.float32) + 1.0) * 0.5
    yy = (y.astype(jnp.float32) + 1.0) * 0.5
    x_y = jnp.einsum('ck,nkhw->nchw', M3, xx) + bias[None, :, None, None]
    y_y = jnp.einsum('ck,nkhw->nchw', M3, yy) + bias[None, :, None, None]

    # avg_lum per channel == mean of DC coefficients == 8 * mean(target plane)
    # (exact for the orthonormal blocksize-8 DCT); computed in f32.
    avg_lum = float(B) * jnp.mean(y_y, axis=(0, 2, 3))            # (3,)
    log_avg = jnp.log(avg_lum + EPS)                              # (3,) -> SMEM

    # lay out every 8x8 block as a column: (N,3,H,W) -> (3, 64, K), bf16,
    # K sample-major.  bf16 slabs halve the kernel's HBM traffic.
    def to_blocks(img):
        b = img.reshape(N, 3, HB, B, WB, B)
        b = b.transpose(1, 3, 5, 0, 2, 4)        # (3, 8, 8, N, HB, WB)
        return b.reshape(3, B * B, K).astype(jnp.bfloat16)

    xb = to_blocks(x_y)
    yb = to_blocks(y_y)

    TK, Kp = _choose_tiles(K, max_tile)
    if Kp != K:                                   # pad K to a multiple of TK
        pad = Kp - K
        xb = jnp.pad(xb, ((0, 0), (0, 0), (0, pad)))
        yb = jnp.pad(yb, ((0, 0), (0, 0), (0, pad)))

    # ---- constants ----
    A = dct_matrix(B)
    D64 = jnp.kron(A, A).astype(jnp.bfloat16)                     # (64, 64)
    t_flat = jnp.asarray(JPEG_QM, jnp.float32).reshape(B * B, 1)
    t_pow = t_flat ** (1.0 - W_CM)                                # t^(1-w)

    grid = (Kp // TK, 3)   # big K axis leads -> balanced v7x megacore split

    partial = pl.pallas_call(
        watson_kernel,
        out_shape=jax.ShapeDtypeStruct((3, 1, Kp), jnp.float32),
        grid=grid,
        in_specs=[
            pl.BlockSpec(memory_space=pltpu.MemorySpace.SMEM),        # log_avg
            pl.BlockSpec((1, B * B, TK), lambda k, c: (c, 0, k)),     # input blocks
            pl.BlockSpec((1, B * B, TK), lambda k, c: (c, 0, k)),     # target blocks
            pl.BlockSpec((B * B, B * B), lambda k, c: (0, 0)),        # A (x) A
            pl.BlockSpec((B * B, 1), lambda k, c: (0, 0)),            # t
            pl.BlockSpec((B * B, 1), lambda k, c: (0, 0)),            # t^(1-w)
        ],
        out_specs=pl.BlockSpec((1, 1, TK), lambda k, c: (c, 0, k)),
        compiler_params=pltpu.CompilerParams(
            dimension_semantics=("parallel", "parallel"),
            vmem_limit_bytes=32 * 1024 * 1024),
    )(log_avg, xb, yb, D64, t_flat, t_pow)

    # ---- tiny finalize in the wrapper: drop padding, per-sample pool,
    #      ^(1/beta), channel weights ----
    per_sample = jnp.sum(partial[:, 0, :K].reshape(3, N, KB), axis=-1) ** (1.0 / BETA)
    cw = jax.nn.softmax(jnp.zeros(3, jnp.float32))                # [1/3, 1/3, 1/3]
    return jnp.sum(cw[:, None] * per_sample, axis=0)              # (N,)


# ---------------- pure-JAX reference (independent blockwise path) -----------
def watson_reference(x, y, blocksize=8):
    N, C, H, W = x.shape
    A = dct_matrix(blocksize)
    T = jnp.asarray(RGB2YCBCR, jnp.float32)[:, :3]
    bias = jnp.asarray(RGB2YCBCR, jnp.float32)[:, 3]
    t = jnp.asarray(JPEG_QM, jnp.float32)
    xx = (x + 1.0) / 2.0
    yy = (y + 1.0) / 2.0
    x_y = jnp.einsum('ck,nkhw->nchw', T, xx) + bias[None, :, None, None]
    y_y = jnp.einsum('ck,nkhw->nchw', T, yy) + bias[None, :, None, None]

    def blocks(img):
        n, h, w = img.shape
        return img.reshape(n, h // 8, 8, w // 8, 8).transpose(0, 1, 3, 2, 4).reshape(n, -1, 8, 8)

    dists = []
    for c in range(3):
        c0 = jnp.einsum('ij,nkjl,ml->nkim', A, blocks(y_y[:, c]), A)
        c1 = jnp.einsum('ij,nkjl,ml->nkim', A, blocks(x_y[:, c]), A)
        avg_lum = jnp.mean(c0[:, :, 0, 0])
        t_l = t[None, None] * (((c0[:, :, 0, 0] + EPS) / (avg_lum + EPS)) ** ALPHA)[:, :, None, None]
        cm = (jnp.abs(c0) + EPS) ** W_CM * t_l ** (1.0 - W_CM)
        m = jnp.maximum(t_l, cm)
        ea = jnp.exp(t_l - m)
        eb = jnp.exp(cm - m)
        s = (t_l * ea + cm * eb) / (ea + eb)
        d = (jnp.abs((c0 - c1) / s) + EPS) ** BETA
        dists.append(jnp.sum(d, axis=(1, 2, 3)) ** (1.0 / BETA))
    return (dists[0] + dists[1] + dists[2]) / 3.0


if __name__ == "__main__":
    key = jax.random.PRNGKey(0)
    k1, k2 = jax.random.split(key)
    N, C, H, W = 2, 3, 16, 16
    x = jax.random.uniform(k1, (N, C, H, W), jnp.float32, -1.0, 1.0)
    y = jax.random.uniform(k2, (N, C, H, W), jnp.float32, -1.0, 1.0)

    out = jax.jit(watson_loss)(x, y)
    jax.block_until_ready(out)

    ref = watson_reference(x, y)
    # bf16 block slabs / DCT matrix introduce ~1% quantization error by design
    np.testing.assert_allclose(np.asarray(out), np.asarray(ref),
                               rtol=3e-2, atol=1e-3)
    print("KERNEL_OK")
</pallas_src>

<mosaic_0001>
module attributes {stable_mosaic.version = 11 : i64} {
  func.func @watson_kernel(%arg0: i32, %arg1: i32, %arg2: memref<3xf32, #tpu.memory_space<smem>>, %arg3: memref<1x64x128xbf16, #tpu.memory_space<vmem>>, %arg4: memref<1x64x128xbf16, #tpu.memory_space<vmem>>, %arg5: memref<64x64xbf16, #tpu.memory_space<vmem>>, %arg6: memref<64x1xf32, #tpu.memory_space<vmem>>, %arg7: memref<64x1xf32, #tpu.memory_space<vmem>>, %arg8: memref<1x1x128xf32, #tpu.memory_space<vmem>>) attributes {dimension_semantics = [#tpu.dimension_semantics<parallel>, #tpu.dimension_semantics<parallel>], iteration_bounds = array<i64: 1, 3>, scalar_prefetch = 0 : i64, scratch_operands = 0 : i64, tpu.core_type = #tpu.core_type<tc>, window_params = [{transform_indices = @transform_0, window_bounds = array<i64: 3>}, {transform_indices = @transform_1, window_bounds = array<i64: 1, 64, 128>}, {transform_indices = @transform_2, window_bounds = array<i64: 1, 64, 128>}, {pipeline_mode = #tpu.pipeline_mode<synchronous>, transform_indices = @transform_3, window_bounds = array<i64: 64, 64>}, {pipeline_mode = #tpu.pipeline_mode<synchronous>, transform_indices = @transform_4, window_bounds = array<i64: 64, 1>}, {pipeline_mode = #tpu.pipeline_mode<synchronous>, transform_indices = @transform_5, window_bounds = array<i64: 64, 1>}, {transform_indices = @transform_6, window_bounds = array<i64: 1, 1, 128>}]} {
    %0 = arith.index_cast %arg1 : i32 to index
    %1 = memref.load %arg2[%0] : memref<3xf32, #tpu.memory_space<smem>>
    %c0 = arith.constant 0 : index
    %c0_0 = arith.constant 0 : index
    %2 = vector.load %arg5[%c0, %c0_0] : memref<64x64xbf16, #tpu.memory_space<vmem>>, vector<64x64xbf16>
    %c0_1 = arith.constant 0 : index
    %c0_2 = arith.constant 0 : index
    %c0_3 = arith.constant 0 : index
    %3 = vector.load %arg3[%c0_1, %c0_2, %c0_3] : memref<1x64x128xbf16, #tpu.memory_space<vmem>>, vector<1x64x128xbf16>
    %4 = vector.shape_cast %3 : vector<1x64x128xbf16> to vector<64x128xbf16>
    %cst = arith.constant dense<0.000000e+00> : vector<64x128xf32>
    %5 = tpu.matmul %2, %4, %cst {dimension_numbers = #tpu.dot_dimension_numbers<[1], [0], [0], [1], [0, 0, 1, 1], [], []>} : vector<64x64xbf16>, vector<64x128xbf16>, vector<64x128xf32> -> vector<64x128xf32>
    %c0_4 = arith.constant 0 : index
    %c0_5 = arith.constant 0 : index
    %c0_6 = arith.constant 0 : index
    %6 = vector.load %arg4[%c0_4, %c0_5, %c0_6] : memref<1x64x128xbf16, #tpu.memory_space<vmem>>, vector<1x64x128xbf16>
    %7 = vector.shape_cast %6 : vector<1x64x128xbf16> to vector<64x128xbf16>
    %cst_7 = arith.constant dense<0.000000e+00> : vector<64x128xf32>
    %8 = tpu.matmul %2, %7, %cst_7 {dimension_numbers = #tpu.dot_dimension_numbers<[1], [0], [0], [1], [0, 0, 1, 1], [], []>} : vector<64x64xbf16>, vector<64x128xbf16>, vector<64x128xf32> -> vector<64x128xf32>
    %9 = arith.subf %8, %5 : vector<64x128xf32>
    %10 = math.absf %9 : vector<64x128xf32>
    %11 = vector.extract_strided_slice %8 {offsets = [0, 0], sizes = [1, 128], strides = [1, 1]} : vector<64x128xf32> to vector<1x128xf32>
    %12 = math.absf %8 : vector<64x128xf32>
    %cst_8 = arith.constant 1.000000e-10 : f32
    %13 = vector.broadcast %cst_8 : f32 to vector<64x128xf32>
    %14 = arith.addf %12, %13 : vector<64x128xf32>
    %cst_9 = arith.constant 1.000000e-10 : f32
    %15 = vector.broadcast %cst_9 : f32 to vector<1x128xf32>
    %16 = arith.addf %11, %15 : vector<1x128xf32>
    %17 = math.log %16 : vector<1x128xf32>
    %18 = vector.broadcast %1 : f32 to vector<1x128xf32>
    %19 = arith.subf %17, %18 : vector<1x128xf32>
    %cst_10 = arith.constant 0.648999989 : f32
    %20 = vector.broadcast %cst_10 : f32 to vector<1x128xf32>
    %21 = arith.mulf %20, %19 : vector<1x128xf32>
    %22 = math.exp %21 : vector<1x128xf32>
    %c0_11 = arith.constant 0 : index
    %c0_12 = arith.constant 0 : index
    %23 = vector.load %arg6[%c0_11, %c0_12] : memref<64x1xf32, #tpu.memory_space<vmem>>, vector<64x1xf32>
    %24 = vector.broadcast %23 : vector<64x1xf32> to vector<64x128xf32>
    %25 = vector.broadcast %22 : vector<1x128xf32> to vector<64x128xf32>
    %26 = arith.mulf %24, %25 : vector<64x128xf32>
    %c0_13 = arith.constant 0 : index
    %c0_14 = arith.constant 0 : index
    %27 = vector.load %arg7[%c0_13, %c0_14] : memref<64x1xf32, #tpu.memory_space<vmem>>, vector<64x1xf32>
    %28 = math.log %14 : vector<64x128xf32>
    %cst_15 = arith.constant 0.699999988 : f32
    %29 = vector.broadcast %cst_15 : f32 to vector<64x128xf32>
    %30 = arith.mulf %29, %28 : vector<64x128xf32>
    %cst_16 = arith.constant 1.947000e-01 : f32
    %31 = vector.broadcast %cst_16 : f32 to vector<1x128xf32>
    %32 = arith.mulf %31, %19 : vector<1x128xf32>
    %33 = vector.broadcast %32 : vector<1x128xf32> to vector<64x128xf32>
    %34 = arith.addf %30, %33 : vector<64x128xf32>
    %35 = math.exp %34 : vector<64x128xf32>
    %36 = vector.broadcast %27 : vector<64x1xf32> to vector<64x128xf32>
    %37 = arith.mulf %36, %35 : vector<64x128xf32>
    %38 = arith.maximumf %26, %37 : vector<64x128xf32>
    %39 = arith.minimumf %26, %37 : vector<64x128xf32>
    %40 = arith.subf %39, %38 : vector<64x128xf32>
    %41 = math.exp %40 : vector<64x128xf32>
    %42 = arith.mulf %39, %41 : vector<64x128xf32>
    %43 = arith.addf %38, %42 : vector<64x128xf32>
    %cst_17 = arith.constant 1.000000e+00 : f32
    %44 = vector.broadcast %cst_17 : f32 to vector<64x128xf32>
    %45 = arith.addf %44, %41 : vector<64x128xf32>
    %46 = tpu.reciprocal %45 {approx = true} : vector<64x128xf32> -> vector<64x128xf32>
    %47 = arith.mulf %43, %46 : vector<64x128xf32>
    %48 = tpu.reciprocal %47 {approx = true} : vector<64x128xf32> -> vector<64x128xf32>
    %49 = arith.mulf %10, %48 : vector<64x128xf32>
    %cst_18 = arith.constant 1.000000e-10 : f32
    %50 = vector.broadcast %cst_18 : f32 to vector<64x128xf32>
    %51 = arith.addf %49, %50 : vector<64x128xf32>
    %52 = arith.mulf %51, %51 : vector<64x128xf32>
    %53 = arith.mulf %52, %52 : vector<64x128xf32>
    %cst_19 = arith.constant dense<0.000000e+00> : vector<128xf32>
    %54 = vector.multi_reduction <add>, %53, %cst_19 [0] : vector<64x128xf32> to vector<128xf32>
    %55 = vector.shape_cast %54 : vector<128xf32> to vector<1x128xf32>
    %c0_20 = arith.constant 0 : index
    %c0_21 = arith.constant 0 : index
    %c0_22 = arith.constant 0 : index
    %56 = vector.load %arg8[%c0_20, %c0_21, %c0_22] : memref<1x1x128xf32, #tpu.memory_space<vmem>>, vector<1x1x128xf32>
    %57 = vector.shape_cast %56 : vector<1x1x128xf32> to vector<1x128xf32>
    %58 = vector.shape_cast %55 : vector<1x128xf32> to vector<1x1x128xf32>
    tpu.vector_store %arg8[%c0_20, %c0_21, %c0_22], %58 {strides = array<i32>} : memref<1x1x128xf32, #tpu.memory_space<vmem>>, vector<1x1x128xf32>,
    return
  }
  func.func @transform_0(%arg0: i32, %arg1: i32) -> i32 {
    %c0_i32 = arith.constant 0 : i32
    %c0_i32_0 = arith.constant 0 : i32
    return %c0_i32 : i32
  }
  func.func @transform_1(%arg0: i32, %arg1: i32) -> (i32, i32, i32) {
    %c0_i32 = arith.constant 0 : i32
    %c0_i32_0 = arith.constant 0 : i32
    return %arg1, %c0_i32, %arg0 : i32, i32, i32
  }
  func.func @transform_2(%arg0: i32, %arg1: i32) -> (i32, i32, i32) {
    %c0_i32 = arith.constant 0 : i32
    %c0_i32_0 = arith.constant 0 : i32
    return %arg1, %c0_i32, %arg0 : i32, i32, i32
  }
  func.func @transform_3(%arg0: i32, %arg1: i32) -> (i32, i32) {
    %c0_i32 = arith.constant 0 : i32
    %c0_i32_0 = arith.constant 0 : i32
    %c0_i32_1 = arith.constant 0 : i32
    return %c0_i32, %c0_i32_0 : i32, i32
  }
  func.func @transform_4(%arg0: i32, %arg1: i32) -> (i32, i32) {
    %c0_i32 = arith.constant 0 : i32
    %c0_i32_0 = arith.constant 0 : i32
    %c0_i32_1 = arith.constant 0 : i32
    return %c0_i32, %c0_i32_0 : i32, i32
  }
  func.func @transform_5(%arg0: i32, %arg1: i32) -> (i32, i32) {
    %c0_i32 = arith.constant 0 : i32
    %c0_i32_0 = arith.constant 0 : i32
    %c0_i32_1 = arith.constant 0 : i32
    return %c0_i32, %c0_i32_0 : i32, i32
  }
  func.func @transform_6(%arg0: i32, %arg1: i32) -> (i32, i32, i32) {
    %c0_i32 = arith.constant 0 : i32
    %c0_i32_0 = arith.constant 0 : i32
    return %arg1, %c0_i32, %arg0 : i32, i32, i32
  }
}

</mosaic_0001>

<llo_original>
// kernel: squeeze.1
$region0: #{squeeze.1}
  %s0 = inlined_call_operand.vmem [shape: f32[3,8], index: 0, kind: input, shape index: {}]
  %s1 = inlined_call_operand.vmem [shape: f32[3,2,4], index: 1, kind: output, shape index: {}]
  $region1: #{squeeze.1} parent=0
    #allocation0 [shape = 'u8[12288]{0}', space=vmem, size = 0x3000, scoped, tag = 'scoped mem for output reshape']
    #allocation1 [shape = 'u8[4096]{0}', space=vmem, size = 0x1000, scoped, tag = 'scoped mem for input reshape']
    %s3 = ssub.s32 16, 1
    %v4 = vld [vmem:[%s0] sm:%s3]
    %5 = vst [vmem:[#allocation1] sm:%s3] %v4
    %v6 = vld [vmem:[#allocation1] sm:$0x7]
    %vm7 = vcmask 31744
    %8 = vst.msk [vmem:[#allocation0] ss:$8 sm:$0x7] %vm7, %v6
    %v9 = vld [vmem:[#allocation1] sm:$0x7]
    %10 = vrot.lane.b32.xlu0 %v9, 124
    %v11 = vpop.permute.xlu0 %10
    %vm12 = vcmask 31744
    %s13 = scalar_lea.vmem [#allocation0], 1
    %14 = vst.msk [vmem:[%s13] ss:$8 sm:$0x7] %vm12, %v11
    %s16 = ssub.s32 4, 1
    %v17 = vld [vmem:[#allocation0] sm:%s16]
    %s19 = ssub.s32 4, 1
    %20 = vst [vmem:[%s1] sm:%s19] %v17
    %s21 = scalar_lea.vmem [#allocation0], 8
    %v22 = vld [vmem:[%s21] sm:%s16]
    %s24 = ssub.s32 4, 1
    %s25 = scalar_lea.vmem %s1, 2
    %26 = vst [vmem:[%s25] sm:%s24] %v22
    %s27 = scalar_lea.vmem [#allocation0], 16
    %v28 = vld [vmem:[%s27] sm:%s16]
    %s30 = ssub.s32 4, 1
    %s31 = scalar_lea.vmem %s1, 4
    %32 = vst [vmem:[%s31] sm:%s30] %v28

// kernel: watson_loss.1
$region0: #{watson_loss.1}
  #allocation0 [shape = 'u32[]', space=smem, size = 0x4, offset = 0x4, fixed_abs, tag = 'smem constant byte address 0x4 - core index']
  #allocation1 [shape = 'u32[72,128]{1,0:T(1,128)}', space=vmem, size = 0x9000, scoped, tag = 'internal scratch']
  %s0 = inlined_call_operand.vmem [shape: f32[3], index: 0, kind: input, shape index: {}]
  %s1 = inlined_call_operand.vmem [shape: bf16[3,64,128], index: 1, kind: input, shape index: {}]
  %s2 = inlined_call_operand.vmem [shape: bf16[3,64,128], index: 2, kind: input, shape index: {}]
  %s3 = inlined_call_operand.vmem [shape: bf16[64,64], index: 3, kind: input, shape index: {}]
  %s4 = inlined_call_operand.vmem [shape: f32[64,1], index: 4, kind: input, shape index: {}]
  %s5 = inlined_call_operand.vmem [shape: f32[64,1], index: 5, kind: input, shape index: {}]
  %s6 = inlined_call_operand.vmem [shape: f32[3,1,128], index: 6, kind: output, shape index: {}]
  %s7 = sld [smem:[#allocation0]]
  $region61: #{watson_loss.1} parent=0
    _
  %s9 = ssub.s32 1, %s7
  %s10 = scalar_select 0, %s9, %s7
  $region1: #{watson_loss.1} parent=0
    #allocation2 [shape = 'u8[512]{0}', space=smem, size = 0x200, scoped, tag = 'input window, operand 0, single buffered']
    #allocation3 [shape = 's32[2]{0}', space=sflag, size = 0x8, scoped, tag = 'scoped memory for watson_loss.1']
    %11 = vsyncpa [#allocation3], 0
    loop: start=0, step=1, limit=5
    $region2: #{watson_loss.1} parent=1 // loop_pre_header
      _
    $region3: #{watson_loss.1} parent=1 // loop_header
      %s13 = sphi 0, %s17
      %p14 = scmp.ge.s32.totalorder %s13, 5
      %s20 = sphi 0, %s32
      %s21 = sphi 0, %s28
      %s22 = sphi 0, %s20
      %s23 = sphi 0, %s21
      %s24 = sphi 0, %s22
      %s25 = sphi 0, %s23
      %s33 = sphi 0, %s33
      %s35 = sphi 0, %s33
      %s36 = sphi 0, %s35
      %s50 = sphi 0, %s36
      %s58 = sphi 0, %s60
      %s61 = sphi 0, %s58
      %s62 = sphi 0, %s61
      %s78 = sphi 0, %s62
      %s86 = sphi 0, %s88
      %s89 = sphi 0, %s86
      %s90 = sphi 0, %s89
      %s106 = sphi 0, %s90
      %s110 = sphi 0, %s110
      %s112 = sphi 0, %s110
      %s113 = sphi 0, %s112
      %s127 = sphi 0, %s113
      %s131 = sphi 0, %s131
      %s133 = sphi 0, %s131
      %s134 = sphi 0, %s133
      %s148 = sphi 0, %s134
      %s152 = sphi 0, %s152
      %s154 = sphi 0, %s152
      %s155 = sphi 0, %s154
      %s169 = sphi 0, %s155
      %s177 = sphi 0, %s179
      %s180 = sphi 0, %s177
      %s181 = sphi 0, %s180
      %s197 = sphi 0, %s181
    $region4: #{watson_loss.1} parent=1 // loop_header_branch
      %16 = sbr.rel (%p14) target = $region8
    $region5: #{watson_loss.1} parent=1 // loop_body
      %s18 = ssub.s32 %s13, 1
      %s19 = ssub.s32 %s13, 2
      %s26 = sadd.s32 1, %s21
      %p27 = scmp.ge.s32.totalorder %s26, 3
      %s28 = scalar_select %p27, 0, %s26
      %s29 = sadd.s32 1, %s20
      %s30 = scalar_select %p27, %s29, %s20
      %p31 = scmp.ge.s32.totalorder %s30, 1
      %s32 = scalar_select %p31, 0, %s30
      %s34 = sadd.s32 %s33, 1
      %p37 = scmp.eq.s32.totalorder %s13, 2
      %p38 = scmp.ne.s32.totalorder %s33, %s35
      %p39 = scmp.eq.s32.totalorder %s13, 0
      %p40 = por %p38, %p39
      %p41 = scmp.ne.s32.totalorder %s33, %s35
      %p42 = scmp.eq.s32.totalorder %s18, 2
      %p43 = por %p41, %p42
      %p44 = scmp.ne.s32.totalorder %s35, %s36
      %p45 = scmp.eq.s32.totalorder %s18, 0
      %p46 = por %p44, %p45
      %p47 = scmp.ne.s32.totalorder %s35, %s36
      %p48 = scmp.eq.s32.totalorder %s19, 2
      %p49 = por %p47, %p48
      %p51 = scmp.ne.s32.totalorder %s36, %s50
      %p52 = scmp.eq.s32.totalorder %s19, 0
      %p53 = por %p51, %p52
      %s54 = ssub.s32 %s21, %s28
      %s55 = ssub.s32 %s20, %s32
      %s56 = sor.u32 %s54, %s55
      %p57 = scmp.eq.s32.totalorder %s56, 0
      %s59 = sadd.s32 %s58, 1
      %s60 = scalar_select %p57, %s58, %s59
      %p63 = pneg %p57
      %p64 = scmp.eq.s32.totalorder %s13, 2
      %p65 = por %p63, %p64
      %p66 = scmp.ne.s32.totalorder %s58, %s61
      %p67 = scmp.eq.s32.totalorder %s13, 0
      %p68 = por %p66, %p67
      %p69 = scmp.ne.s32.totalorder %s58, %s61
      %p70 = scmp.eq.s32.totalorder %s18, 2
      %p71 = por %p69, %p70
      %p72 = scmp.ne.s32.totalorder %s61, %s62
      %p73 = scmp.eq.s32.totalorder %s18, 0
      %p74 = por %p72, %p73
      %p75 = scmp.ne.s32.totalorder %s61, %s62
      %p76 = scmp.eq.s32.totalorder %s19, 2
      %p77 = por %p75, %p76
      %p79 = scmp.ne.s32.totalorder %s62, %s78
      %p80 = scmp.eq.s32.totalorder %s19, 0
      %p81 = por %p79, %p80
      %s82 = ssub.s32 %s21, %s28
      %s83 = ssub.s32 %s20, %s32
      %s84 = sor.u32 %s82, %s83
      %p85 = scmp.eq.s32.totalorder %s84, 0
      %s87 = sadd.s32 %s86, 1
      %s88 = scalar_select %p85, %s86, %s87
      %p91 = pneg %p85
      %p92 = scmp.eq.s32.totalorder %s13, 2
      %p93 = por %p91, %p92
      %p94 = scmp.ne.s32.totalorder %s86, %s89
      %p95 = scmp.eq.s32.totalorder %s13, 0
      %p96 = por %p94, %p95
      %p97 = scmp.ne.s32.totalorder %s86, %s89
      %p98 = scmp.eq.s32.totalorder %s18, 2
      %p99 = por %p97, %p98
      %p100 = scmp.ne.s32.totalorder %s89, %s90
      %p101 = scmp.eq.s32.totalorder %s18, 0
      %p102 = por %p100, %p101
      %p103 = scmp.ne.s32.totalorder %s89, %s90
      %p104 = scmp.eq.s32.totalorder %s19, 2
      %p105 = por %p103, %p104
      %p107 = scmp.ne.s32.totalorder %s90, %s106
      %p108 = scmp.eq.s32.totalorder %s19, 0
      %p109 = por %p107, %p108
      %s111 = sadd.s32 %s110, 1
      %p114 = scmp.eq.s32.totalorder %s13, 2
      %p115 = scmp.ne.s32.totalorder %s110, %s112
      %p116 = scmp.eq.s32.totalorder %s13, 0
      %p117 = por %p115, %p116
      %p118 = scmp.ne.s32.totalorder %s110, %s112
      %p119 = scmp.eq.s32.totalorder %s18, 2
      %p120 = por %p118, %p119
      %p121 = scmp.ne.s32.totalorder %s112, %s113
      %p122 = scmp.eq.s32.totalorder %s18, 0
      %p123 = por %p121, %p122
      %p124 = scmp.ne.s32.totalorder %s112, %s113
      %p125 = scmp.eq.s32.totalorder %s19, 2
      %p126 = por %p124, %p125
      %p128 = scmp.ne.s32.totalorder %s113, %s127
      %p129 = scmp.eq.s32.totalorder %s19, 0
      %p130 = por %p128, %p129
      %s132 = sadd.s32 %s131, 1
      %p135 = scmp.eq.s32.totalorder %s13, 2
      %p136 = scmp.ne.s32.totalorder %s131, %s133
      %p137 = scmp.eq.s32.totalorder %s13, 0
      %p138 = por %p136, %p137
      %p139 = scmp.ne.s32.totalorder %s131, %s133
      %p140 = scmp.eq.s32.totalorder %s18, 2
      %p141 = por %p139, %p140
      %p142 = scmp.ne.s32.totalorder %s133, %s134
      %p143 = scmp.eq.s32.totalorder %s18, 0
      %p144 = por %p142, %p143
      %p145 = scmp.ne.s32.totalorder %s133, %s134
      %p146 = scmp.eq.s32.totalorder %s19, 2
      %p147 = por %p145, %p146
      %p149 = scmp.ne.s32.totalorder %s134, %s148
      %p150 = scmp.eq.s32.totalorder %s19, 0
      %p151 = por %p149, %p150
      %s153 = sadd.s32 %s152, 1
      %p156 = scmp.eq.s32.totalorder %s13, 2
      %p157 = scmp.ne.s32.totalorder %s152, %s154
      %p158 = scmp.eq.s32.totalorder %s13, 0
      %p159 = por %p157, %p158
      %p160 = scmp.ne.s32.totalorder %s152, %s154
      %p161 = scmp.eq.s32.totalorder %s18, 2
      %p162 = por %p160, %p161
      %p163 = scmp.ne.s32.totalorder %s154, %s155
      %p164 = scmp.eq.s32.totalorder %s18, 0
      %p165 = por %p163, %p164
      %p166 = scmp.ne.s32.totalorder %s154, %s155
      %p167 = scmp.eq.s32.totalorder %s19, 2
      %p168 = por %p166, %p167
      %p170 = scmp.ne.s32.totalorder %s155, %s169
      %p171 = scmp.eq.s32.totalorder %s19, 0
      %p172 = por %p170, %p171
      %s173 = ssub.s32 %s21, %s28
      %s174 = ssub.s32 %s20, %s32
      %s175 = sor.u32 %s173, %s174
      %p176 = scmp.eq.s32.totalorder %s175, 0
      %s178 = sadd.s32 %s177, 1
      %s179 = scalar_select %p176, %s177, %s178
      %p182 = pneg %p176
      %p183 = scmp.eq.s32.totalorder %s13, 2
      %p184 = por %p182, %p183
      %p185 = scmp.ne.s32.totalorder %s177, %s180
      %p186 = scmp.eq.s32.totalorder %s13, 0
      %p187 = por %p185, %p186
      %p188 = scmp.ne.s32.totalorder %s177, %s180
      %p189 = scmp.eq.s32.totalorder %s18, 2
      %p190 = por %p188, %p189
      %p191 = scmp.ne.s32.totalorder %s180, %s181
      %p192 = scmp.eq.s32.totalorder %s18, 0
      %p193 = por %p191, %p192
      %p194 = scmp.ne.s32.totalorder %s180, %s181
      %p195 = scmp.eq.s32.totalorder %s19, 2
      %p196 = por %p194, %p195
      %p198 = scmp.ne.s32.totalorder %s181, %s197
      %p199 = scmp.eq.s32.totalorder %s19, 0
      %p200 = por %p198, %p199
      %p201 = scmp.le.s32.totalorder 1, %s13
      %p202 = scmp.lt.s32.totalorder %s13, 4
      %p203 = pnand %p201, %p202
      %p204 = pneg %p203
      // Predicated region
      $region9: #{watson_loss.1} parent=5 // pred_check
        _
      $region10: #{watson_loss.1} parent=5 // pred_check_branch
        %206 = sbr.rel (%p203) target = $region12
      $region11: #{watson_loss.1} parent=5 // pred_region
        %s207 = ssub.s32 %s13, 1
        // Predicated region
        $region13: #{watson_loss.1} parent=11 // pred_check
          %p208 = pneg %p46
        $region14: #{watson_loss.1} parent=11 // pred_check_branch
          %210 = sbr.rel (%p208) target = $region16
        $region15: #{watson_loss.1} parent=11 // pred_region
          %212 = vsyncadd [#allocation3], 0
          %s214 = sshll.u32 %s0, 4
          %s215 = int_to_ptr.vmem [resolvable:$true] %s214
          %217 = dma.vmem_to_smem %s215, 16, [#allocation2], [#allocation3]
        $region16: #{watson_loss.1} parent=11 // pred_fallthru
          _
        // Predicated region
        $region17: #{watson_loss.1} parent=11 // pred_check
          %p218 = pneg %p123
        $region18: #{watson_loss.1} parent=11 // pred_check_branch
          %220 = sbr.rel (%p218) target = $region20
        $region19: #{watson_loss.1} parent=11 // pred_region
          _
        $region20: #{watson_loss.1} parent=11 // pred_fallthru
          _
        // Predicated region
        $region21: #{watson_loss.1} parent=11 // pred_check
          %p221 = pneg %p144
        $region22: #{watson_loss.1} parent=11 // pred_check_branch
          %223 = sbr.rel (%p221) target = $region24
        $region23: #{watson_loss.1} parent=11 // pred_region
          _
        $region24: #{watson_loss.1} parent=11 // pred_fallthru
          _
        // Predicated region
        $region25: #{watson_loss.1} parent=11 // pred_check
          %p224 = pneg %p165
        $region26: #{watson_loss.1} parent=11 // pred_check_branch
          %226 = sbr.rel (%p224) target = $region28
        $region27: #{watson_loss.1} parent=11 // pred_region
          _
        $region28: #{watson_loss.1} parent=11 // pred_fallthru
          _
      $region12: #{watson_loss.1} parent=5 // pred_fallthru
        _
      %p227 = scmp.lt.s32.totalorder %s13, 3
      // Predicated region
      $region29: #{watson_loss.1} parent=5 // pred_check
        %p228 = pneg %p227
      $region30: #{watson_loss.1} parent=5 // pred_check_branch
        %230 = sbr.rel (%p228) target = $region32
      $region31: #{watson_loss.1} parent=5 // pred_region
        // Predicated region
        $region33: #{watson_loss.1} parent=31 // pred_check
          %p231 = pneg %p68
        $region34: #{watson_loss.1} parent=31 // pred_check_branch
          %233 = sbr.rel (%p231) target = $region36
        $region35: #{watson_loss.1} parent=31 // pred_region
          %p234 = scmp.lt.s32.totalorder %s21, 2
          %s235 = scalar_select %p234, %s21, 2
          %p236 = scmp.lt.s32.totalorder %s20, 0
          %s237 = scalar_select %p236, %s20, 0
          %s238 = smul.addr %s235, 8
          %s239 = sadd.s32 %s237, %s238
          %s240 = smul.addr %s239, 4
          %s241 = scalar_lea.vmem %s1, %s240
        $region36: #{watson_loss.1} parent=31 // pred_fallthru
          _
        // Predicated region
        $region37: #{watson_loss.1} parent=31 // pred_check
          %p242 = pneg %p96
        $region38: #{watson_loss.1} parent=31 // pred_check_branch
          %244 = sbr.rel (%p242) target = $region40
        $region39: #{watson_loss.1} parent=31 // pred_region
          %p245 = scmp.lt.s32.totalorder %s21, 2
          %s246 = scalar_select %p245, %s21, 2
          %p247 = scmp.lt.s32.totalorder %s20, 0
          %s248 = scalar_select %p247, %s20, 0
          %s249 = smul.addr %s246, 8
          %s250 = sadd.s32 %s248, %s249
          %s251 = smul.addr %s250, 4
          %s252 = scalar_lea.vmem %s2, %s251
        $region40: #{watson_loss.1} parent=31 // pred_fallthru
          _
      $region32: #{watson_loss.1} parent=5 // pred_fallthru
        _
      %p253 = scmp.le.s32.totalorder 1, %s13
      %p254 = scmp.lt.s32.totalorder %s13, 4
      %p255 = pnand %p253, %p254
      %p256 = pneg %p255
      // Predicated region
      $region41: #{watson_loss.1} parent=5 // pred_check
        _
      $region42: #{watson_loss.1} parent=5 // pred_check_branch
        %258 = sbr.rel (%p255) target = $region44
      $region43: #{watson_loss.1} parent=5 // pred_region
        %s259 = ssub.s32 %s13, 1
        // Predicated region
        $region45: #{watson_loss.1} parent=43 // pred_check
          %p260 = pneg %p46
        $region46: #{watson_loss.1} parent=43 // pred_check_branch
          %262 = sbr.rel (%p260) target = $region48
        $region47: #{watson_loss.1} parent=43 // pred_region
          %264 = dma.done [#allocation3], 16
        $region48: #{watson_loss.1} parent=43 // pred_fallthru
          _
        %265 = sfence
        %p266 = pneg %p46
        %p267 = pneg %p43
        %p268 = scmp.lt.s32.totalorder %s23, 2
        %s269 = scalar_select %p268, %s23, 2
        %p270 = scmp.lt.s32.totalorder %s22, 0
        %s271 = scalar_select %p270, %s22, 0
        %s272 = smul.addr %s269, 8
        %s273 = sadd.s32 %s271, %s272
        %s274 = smul.addr %s273, 4
        %s275 = scalar_lea.vmem %s1, %s274
        %p276 = pneg %p74
        %p277 = pneg %p71
        %p278 = scmp.lt.s32.totalorder %s23, 2
        %s279 = scalar_select %p278, %s23, 2
        %p280 = scmp.lt.s32.totalorder %s22, 0
        %s281 = scalar_select %p280, %s22, 0
        %s282 = smul.addr %s279, 8
        %s283 = sadd.s32 %s281, %s282
        %s284 = smul.addr %s283, 4
        %s285 = scalar_lea.vmem %s2, %s284
        %p286 = pneg %p102
        %p287 = pneg %p99
        %p288 = pneg %p123
        %p289 = pneg %p120
        %p290 = pneg %p144
        %p291 = pneg %p141
        %p292 = pneg %p165
        %p293 = pneg %p162
        %p294 = pneg %p193
        %p295 = pneg %p190
        %p296 = scmp.lt.s32.totalorder %s23, 2
        %s297 = scalar_select %p296, %s23, 2
        %p298 = scmp.lt.s32.totalorder %s22, 0
        %s299 = scalar_select %p298, %s22, 0
        %s300 = sadd.s32 %s299, %s297
        %s301 = scalar_lea.vmem %s6, %s300
        %p302 = scmp.lt.s32.totalorder %s23, 2
        %s303 = scalar_select %p302, %s23, 2
        %p304 = scmp.lt.s32.totalorder %s22, 0
        %s305 = scalar_select %p304, %s22, 0
        %s306 = smul.addr %s303, 8
        %s307 = sadd.s32 %s305, %s306
        %s308 = smul.addr %s307, 4
        %s309 = scalar_lea.vmem %s1, %s308
        %p310 = scmp.lt.s32.totalorder %s23, 2
        %s311 = scalar_select %p310, %s23, 2
        %p312 = scmp.lt.s32.totalorder %s22, 0
        %s313 = scalar_select %p312, %s22, 0
        %s314 = smul.addr %s311, 8
        %s315 = sadd.s32 %s313, %s314
        %s316 = smul.addr %s315, 4
        %s317 = scalar_lea.vmem %s2, %s316
        %p318 = scmp.lt.s32.totalorder %s23, 2
        %s319 = scalar_select %p318, %s23, 2
        %p320 = scmp.lt.s32.totalorder %s22, 0
        %s321 = scalar_select %p320, %s22, 0
        %s322 = sadd.s32 %s321, %s319
        %s323 = scalar_lea.vmem %s6, %s322
        %s325 = sld [smem:[#allocation2 + %s23]]
        %v326 = vld [vmem:[%s3] sm:$0xf]
        %v327 = vld [vmem:[%s3 + $0x4] sm:$0xf]
        %v328 = vld [vmem:[%s3 + $0x8] sm:$0xf]
        %v329 = vld [vmem:[%s3 + $0xc] sm:$0xf]
        %v330 = vld [vmem:[%s3 + $0x10] sm:$0xf]
        %v331 = vld [vmem:[%s3 + $0x14] sm:$0xf]
        %v332 = vld [vmem:[%s3 + $0x18] sm:$0xf]
        %v333 = vld [vmem:[%s3 + $0x1c] sm:$0xf]
        %v334 = vld [vmem:[%s309] sm:$0xf]
        %v335 = vld [vmem:[%s309 + $0x4] sm:$0xf]
        %v336 = vld [vmem:[%s309 + $0x8] sm:$0xf]
        %v337 = vld [vmem:[%s309 + $0xc] sm:$0xf]
        %v338 = vld [vmem:[%s309 + $0x10] sm:$0xf]
        %v339 = vld [vmem:[%s309 + $0x14] sm:$0xf]
        %v340 = vld [vmem:[%s309 + $0x18] sm:$0xf]
        %v341 = vld [vmem:[%s309 + $0x1c] sm:$0xf]
        %v350 = vunpack.c.l.b16 %v326
        %v351 = vunpack.c.l.b16 %v327
        %v352 = vunpack.c.l.b16 %v328
        %v353 = vunpack.c.l.b16 %v329
        %v354 = vunpack.c.l.b16 %v330
        %v355 = vunpack.c.l.b16 %v331
        %v356 = vunpack.c.l.b16 %v332
        %v357 = vunpack.c.l.b16 %v333
        %v358 = vpack.c.b16 %v351, %v350
        %v359 = vpack.c.b16 %v353, %v352
        %v360 = vpack.c.b16 %v355, %v354
        %v361 = vpack.c.b16 %v357, %v356
        %v370 = vunpack.c.l.b16 %v334
        %v371 = vunpack.c.l.b16 %v335
        %v372 = vunpack.c.l.b16 %v336
        %v373 = vunpack.c.l.b16 %v337
        %v374 = vunpack.c.l.b16 %v338
        %v375 = vunpack.c.l.b16 %v339
        %v376 = vunpack.c.l.b16 %v340
        %v377 = vunpack.c.l.b16 %v341
        %v378 = vpack.c.b16 %v371, %v370
        %v379 = vpack.c.b16 %v373, %v372
        %v380 = vpack.c.b16 %v375, %v374
        %v381 = vpack.c.b16 %v377, %v376
        %vm386 = vcmask 523264
        %v388 = vsel %vm386, %v358, 0
        %v391 = vsel %vm386, %v359, 0
        %v394 = vsel %vm386, %v360, 0
        %v397 = vsel %vm386, %v361, 0
        %399 = vmatpush.bf16.msra.mxu0 0
        %400 = vmatpush.bf16.msra.mxu0 0
        %401 = vmatpush.bf16.msra.mxu0 0
        %402 = vmatpush.bf16.msra.mxu0 0
        %403 = vmatpush.bf16.msra.mxu0 %v381
        %404 = vmatpush.bf16.msra.mxu0 %v380
        %405 = vmatpush.bf16.msra.mxu0 %v379
        %406 = vmatpush.bf16.msra.mxu0 %v378
        %407 = vmatmul.bf16.gmra.mxu0 %v388
        %v408 = vpop.f32.mrf.mxu0
        %v409 = vadd.f32 0.0, %v408
        %v410 = vpop.f32.mrf.mxu0
        %v411 = vadd.f32 0.0, %v410
        %412 = vmatmul.bf16.gmra.mxu0 %v391
        %v413 = vpop.f32.mrf.mxu0
        %v414 = vadd.f32 0.0, %v413
        %v415 = vpop.f32.mrf.mxu0
        %v416 = vadd.f32 0.0, %v415
        %417 = vmatmul.bf16.gmra.mxu0 %v394
        %v418 = vpop.f32.mrf.mxu0
        %v419 = vadd.f32 0.0, %v418
        %v420 = vpop.f32.mrf.mxu0
        %v421 = vadd.f32 0.0, %v420
        %422 = vmatmul.bf16.gmra.mxu0 %v397
        %v423 = vpop.f32.mrf.mxu0
        %v424 = vadd.f32 0.0, %v423
        %v425 = vpop.f32.mrf.mxu0
        %v426 = vadd.f32 0.0, %v425
        %427 = vdwg.mxu0
        %v428 = vld [vmem:[%s317] sm:$0xf]
        %v429 = vld [vmem:[%s317 + $0x4] sm:$0xf]
        %v430 = vld [vmem:[%s317 + $0x8] sm:$0xf]
        %v431 = vld [vmem:[%s317 + $0xc] sm:$0xf]
        %v432 = vld [vmem:[%s317 + $0x10] sm:$0xf]
        %v433 = vld [vmem:[%s317 + $0x14] sm:$0xf]
        %v434 = vld [vmem:[%s317 + $0x18] sm:$0xf]
        %v435 = vld [vmem:[%s317 + $0x1c] sm:$0xf]
        %v444 = vunpack.c.l.b16 %v428
        %v445 = vunpack.c.l.b16 %v429
        %v446 = vunpack.c.l.b16 %v430
        %v447 = vunpack.c.l.b16 %v431
        %v448 = vunpack.c.l.b16 %v432
        %v449 = vunpack.c.l.b16 %v433
        %v450 = vunpack.c.l.b16 %v434
        %v451 = vunpack.c.l.b16 %v435
        %v452 = vpack.c.b16 %v445, %v444
        %v453 = vpack.c.b16 %v447, %v446
        %v454 = vpack.c.b16 %v449, %v448
        %v455 = vpack.c.b16 %v451, %v450
        %460 = vmatpush.bf16.msra.mxu0 0
        %461 = vmatpush.bf16.msra.mxu0 0
        %462 = vmatpush.bf16.msra.mxu0 0
        %463 = vmatpush.bf16.msra.mxu0 0
        %464 = vmatpush.bf16.msra.mxu0 %v455
        %465 = vmatpush.bf16.msra.mxu0 %v454
        %466 = vmatpush.bf16.msra.mxu0 %v453
        %467 = vmatpush.bf16.msra.mxu0 %v452
        %468 = vmatmul.bf16.gmra.mxu0 %v388
        %v469 = vpop.f32.mrf.mxu0
        %v470 = vadd.f32 0.0, %v469
        %v471 = vpop.f32.mrf.mxu0
        %v472 = vadd.f32 0.0, %v471
        %473 = vmatmul.bf16.gmra.mxu0 %v391
        %v474 = vpop.f32.mrf.mxu0
        %v475 = vadd.f32 0.0, %v474
        %v476 = vpop.f32.mrf.mxu0
        %v477 = vadd.f32 0.0, %v476
        %478 = vmatmul.bf16.gmra.mxu0 %v394
        %v479 = vpop.f32.mrf.mxu0
        %v480 = vadd.f32 0.0, %v479
        %v481 = vpop.f32.mrf.mxu0
        %v482 = vadd.f32 0.0, %v481
        %483 = vmatmul.bf16.gmra.mxu0 %v397
        %v484 = vpop.f32.mrf.mxu0
        %v485 = vadd.f32 0.0, %v484
        %v486 = vpop.f32.mrf.mxu0
        %v487 = vadd.f32 0.0, %v486
        %488 = vdwg.mxu0
        %v489 = vsub.f32 %v470, %v409
        %v490 = vsub.f32 %v472, %v411
        %v491 = vsub.f32 %v475, %v414
        %v492 = vsub.f32 %v477, %v416
        %v493 = vsub.f32 %v480, %v419
        %v494 = vsub.f32 %v482, %v421
        %v495 = vsub.f32 %v485, %v424
        %v496 = vsub.f32 %v487, %v426
        %v497 = vand.u32 2147483647, %v489
        %v498 = vand.u32 2147483647, %v490
        %v499 = vand.u32 2147483647, %v491
        %v500 = vand.u32 2147483647, %v492
        %v501 = vand.u32 2147483647, %v493
        %v502 = vand.u32 2147483647, %v494
        %v503 = vand.u32 2147483647, %v495
        %v504 = vand.u32 2147483647, %v496
        %v505 = vand.u32 2147483647, %v470
        %v506 = vand.u32 2147483647, %v472
        %v507 = vand.u32 2147483647, %v475
        %v508 = vand.u32 2147483647, %v477
        %v509 = vand.u32 2147483647, %v480
        %v510 = vand.u32 2147483647, %v482
        %v511 = vand.u32 2147483647, %v485
        %v512 = vand.u32 2147483647, %v487
        %v513 = vadd.f32 %v505, 1e-10
        %v514 = vadd.f32 %v506, 1e-10
        %v515 = vadd.f32 %v507, 1e-10
        %v516 = vadd.f32 %v508, 1e-10
        %v517 = vadd.f32 %v509, 1e-10
        %v518 = vadd.f32 %v510, 1e-10
        %v519 = vadd.f32 %v511, 1e-10
        %v520 = vadd.f32 %v512, 1e-10
        %v521 = vadd.f32 %v470, 1e-10
        %v522 = vlog2.pop %v521
        %v523 = vmul.f32 %v522, 0.6931472
        %v524 = vstv %s325
        %v525 = vsub.f32 %v523, %v524
        %v526 = vmul.f32 %v525, 0.649
        %v527 = vmul.f32 %v526, 1.442695
        %v528 = vpow.pop %v527
        %v529 = vld [vmem:[%s4] sm:$0xff]
        %v530 = vld [vmem:[%s4 + $0x8] sm:$0xff]
        %v531 = vld [vmem:[%s4 + $0x10] sm:$0xff]
        %v532 = vld [vmem:[%s4 + $0x18] sm:$0xff]
        %v533 = vld [vmem:[%s4 + $0x20] sm:$0xff]
        %v534 = vld [vmem:[%s4 + $0x28] sm:$0xff]
        %v535 = vld [vmem:[%s4 + $0x30] sm:$0xff]
        %v536 = vld [vmem:[%s4 + $0x38] sm:$0xff]
        %538 = vset.pattern.permute.xlu0 0
        %539 = vperm.xlu0 %538, %v529
        %v540 = vpop.permute.xlu0 %539
        %543 = vset.pattern.permute.xlu0 0
        %544 = vperm.xlu0 %543, %v530
        %v545 = vpop.permute.xlu0 %544
        %548 = vset.pattern.permute.xlu0 0
        %549 = vperm.xlu0 %548, %v531
        %v550 = vpop.permute.xlu0 %549
        %553 = vset.pattern.permute.xlu0 0
        %554 = vperm.xlu0 %553, %v532
        %v555 = vpop.permute.xlu0 %554
        %558 = vset.pattern.permute.xlu0 0
        %559 = vperm.xlu0 %558, %v533
        %v560 = vpop.permute.xlu0 %559
        %563 = vset.pattern.permute.xlu0 0
        %564 = vperm.xlu0 %563, %v534
        %v565 = vpop.permute.xlu0 %564
        %568 = vset.pattern.permute.xlu0 0
        %569 = vperm.xlu0 %568, %v535
        %v570 = vpop.permute.xlu0 %569
        %573 = vset.pattern.permute.xlu0 0
        %574 = vperm.xlu0 %573, %v536
        %v575 = vpop.permute.xlu0 %574
        %v577 = vperm.slane %v528, 0
        %v578 = vmul.f32 %v540, %v577
        %v579 = vmul.f32 %v545, %v577
        %v580 = vmul.f32 %v550, %v577
        %v581 = vmul.f32 %v555, %v577
        %v582 = vmul.f32 %v560, %v577
        %v583 = vmul.f32 %v565, %v577
        %v584 = vmul.f32 %v570, %v577
        %v585 = vmul.f32 %v575, %v577
        %v586 = vld [vmem:[%s5] sm:$0xff]
        %v587 = vld [vmem:[%s5 + $0x8] sm:$0xff]
        %v588 = vld [vmem:[%s5 + $0x10] sm:$0xff]
        %v589 = vld [vmem:[%s5 + $0x18] sm:$0xff]
        %v590 = vld [vmem:[%s5 + $0x20] sm:$0xff]
        %v591 = vld [vmem:[%s5 + $0x28] sm:$0xff]
        %v592 = vld [vmem:[%s5 + $0x30] sm:$0xff]
        %v593 = vld [vmem:[%s5 + $0x38] sm:$0xff]
        %v594 = vlog2.pop %v513
        %v595 = vmul.f32 %v594, 0.6931472
        %v596 = vlog2.pop %v514
        %v597 = vmul.f32 %v596, 0.6931472
        %v598 = vlog2.pop %v515
        %v599 = vmul.f32 %v598, 0.6931472
        %v600 = vlog2.pop %v516
        %v601 = vmul.f32 %v600, 0.6931472
        %v602 = vlog2.pop %v517
        %v603 = vmul.f32 %v602, 0.6931472
        %v604 = vlog2.pop %v518
        %v605 = vmul.f32 %v604, 0.6931472
        %v606 = vlog2.pop %v519
        %v607 = vmul.f32 %v606, 0.6931472
        %v608 = vlog2.pop %v520
        %v609 = vmul.f32 %v608, 0.6931472
        %v610 = vmul.f32 %v595, 0.7
        %v611 = vmul.f32 %v597, 0.7
        %v612 = vmul.f32 %v599, 0.7
        %v613 = vmul.f32 %v601, 0.7
        %v614 = vmul.f32 %v603, 0.7
        %v615 = vmul.f32 %v605, 0.7
        %v616 = vmul.f32 %v607, 0.7
        %v617 = vmul.f32 %v609, 0.7
        %v618 = vmul.f32 %v525, 0.1947
        %v619 = vperm.slane %v618, 0
        %v620 = vadd.f32 %v610, %v619
        %v621 = vadd.f32 %v611, %v619
        %v622 = vadd.f32 %v612, %v619
        %v623 = vadd.f32 %v613, %v619
        %v624 = vadd.f32 %v614, %v619
        %v625 = vadd.f32 %v615, %v619
        %v626 = vadd.f32 %v616, %v619
        %v627 = vadd.f32 %v617, %v619
        %v628 = vmul.f32 %v620, 1.442695
        %v629 = vpow.pop %v628
        %v630 = vmul.f32 %v621, 1.442695
        %v631 = vpow.pop %v630
        %v632 = vmul.f32 %v622, 1.442695
        %v633 = vpow.pop %v632
        %v634 = vmul.f32 %v623, 1.442695
        %v635 = vpow.pop %v634
        %v636 = vmul.f32 %v624, 1.442695
        %v637 = vpow.pop %v636
        %v638 = vmul.f32 %v625, 1.442695
        %v639 = vpow.pop %v638
        %v640 = vmul.f32 %v626, 1.442695
        %v641 = vpow.pop %v640
        %v642 = vmul.f32 %v627, 1.442695
        %v643 = vpow.pop %v642
        %645 = vset.pattern.permute.xlu0 0
        %646 = vperm.xlu0 %645, %v586
        %v647 = vpop.permute.xlu0 %646
        %650 = vset.pattern.permute.xlu0 0
        %651 = vperm.xlu0 %650, %v587
        %v652 = vpop.permute.xlu0 %651
        %655 = vset.pattern.permute.xlu0 0
        %656 = vperm.xlu0 %655, %v588
        %v657 = vpop.permute.xlu0 %656
        %660 = vset.pattern.permute.xlu0 0
        %661 = vperm.xlu0 %660, %v589
        %v662 = vpop.permute.xlu0 %661
        %665 = vset.pattern.permute.xlu0 0
        %666 = vperm.xlu0 %665, %v590
        %v667 = vpop.permute.xlu0 %666
        %670 = vset.pattern.permute.xlu0 0
        %671 = vperm.xlu0 %670, %v591
        %v672 = vpop.permute.xlu0 %671
        %675 = vset.pattern.permute.xlu0 0
        %676 = vperm.xlu0 %675, %v592
        %v677 = vpop.permute.xlu0 %676
        %680 = vset.pattern.permute.xlu0 0
        %681 = vperm.xlu0 %680, %v593
        %v682 = vpop.permute.xlu0 %681
        %v684 = vmul.f32 %v647, %v629
        %v685 = vmul.f32 %v652, %v631
        %v686 = vmul.f32 %v657, %v633
        %v687 = vmul.f32 %v662, %v635
        %v688 = vmul.f32 %v667, %v637
        %v689 = vmul.f32 %v672, %v639
        %v690 = vmul.f32 %v677, %v641
        %v691 = vmul.f32 %v682, %v643
        %v692 = vmax.f32 %v578, %v684
        %v693 = vmax.f32 %v579, %v685
        %v694 = vmax.f32 %v580, %v686
        %v695 = vmax.f32 %v581, %v687
        %v696 = vmax.f32 %v582, %v688
        %v697 = vmax.f32 %v583, %v689
        %v698 = vmax.f32 %v584, %v690
        %v699 = vmax.f32 %v585, %v691
        %v700 = vmin.f32 %v578, %v684
        %v701 = vmin.f32 %v579, %v685
        %v702 = vmin.f32 %v580, %v686
        %v703 = vmin.f32 %v581, %v687
        %v704 = vmin.f32 %v582, %v688
        %v705 = vmin.f32 %v583, %v689
        %v706 = vmin.f32 %v584, %v690
        %v707 = vmin.f32 %v585, %v691
        %v708 = vsub.f32 %v700, %v692
        %v709 = vsub.f32 %v701, %v693
        %v710 = vsub.f32 %v702, %v694
        %v711 = vsub.f32 %v703, %v695
        %v712 = vsub.f32 %v704, %v696
        %v713 = vsub.f32 %v705, %v697
        %v714 = vsub.f32 %v706, %v698
        %v715 = vsub.f32 %v707, %v699
        %v716 = vmul.f32 %v708, 1.442695
        %v717 = vpow.pop %v716
        %v718 = vmul.f32 %v709, 1.442695
        %v719 = vpow.pop %v718
        %v720 = vmul.f32 %v710, 1.442695
        %v721 = vpow.pop %v720
        %v722 = vmul.f32 %v711, 1.442695
        %v723 = vpow.pop %v722
        %v724 = vmul.f32 %v712, 1.442695
        %v725 = vpow.pop %v724
        %v726 = vmul.f32 %v713, 1.442695
        %v727 = vpow.pop %v726
        %v728 = vmul.f32 %v714, 1.442695
        %v729 = vpow.pop %v728
        %v730 = vmul.f32 %v715, 1.442695
        %v731 = vpow.pop %v730
        %v732 = vmul.f32 %v700, %v717
        %v733 = vmul.f32 %v701, %v719
        %v734 = vmul.f32 %v702, %v721
        %v735 = vmul.f32 %v703, %v723
        %v736 = vmul.f32 %v704, %v725
        %v737 = vmul.f32 %v705, %v727
        %v738 = vmul.f32 %v706, %v729
        %v739 = vmul.f32 %v707, %v731
        %v740 = vadd.f32 %v692, %v732
        %v741 = vadd.f32 %v693, %v733
        %v742 = vadd.f32 %v694, %v734
        %v743 = vadd.f32 %v695, %v735
        %v744 = vadd.f32 %v696, %v736
        %v745 = vadd.f32 %v697, %v737
        %v746 = vadd.f32 %v698, %v738
        %v747 = vadd.f32 %v699, %v739
        %v748 = vadd.f32 %v717, 1.0
        %v749 = vadd.f32 %v719, 1.0
        %v750 = vadd.f32 %v721, 1.0
        %v751 = vadd.f32 %v723, 1.0
        %v752 = vadd.f32 %v725, 1.0
        %v753 = vadd.f32 %v727, 1.0
        %v754 = vadd.f32 %v729, 1.0
        %v755 = vadd.f32 %v731, 1.0
        %v756 = vrcp.pop %v748
        %v757 = vrcp.pop %v749
        %v758 = vrcp.pop %v750
        %v759 = vrcp.pop %v751
        %v760 = vrcp.pop %v752
        %v761 = vrcp.pop %v753
        %v762 = vrcp.pop %v754
        %v763 = vrcp.pop %v755
        %v764 = vmul.f32 %v740, %v756
        %v765 = vmul.f32 %v741, %v757
        %v766 = vmul.f32 %v742, %v758
        %v767 = vmul.f32 %v743, %v759
        %v768 = vmul.f32 %v744, %v760
        %v769 = vmul.f32 %v745, %v761
        %v770 = vmul.f32 %v746, %v762
        %v771 = vmul.f32 %v747, %v763
        %v772 = vrcp.pop %v764
        %v773 = vrcp.pop %v765
        %v774 = vrcp.pop %v766
        %v775 = vrcp.pop %v767
        %v776 = vrcp.pop %v768
        %v777 = vrcp.pop %v769
        %v778 = vrcp.pop %v770
        %v779 = vrcp.pop %v771
        %v780 = vmul.f32 %v497, %v772
        %v781 = vmul.f32 %v498, %v773
        %v782 = vmul.f32 %v499, %v774
        %v783 = vmul.f32 %v500, %v775
        %v784 = vmul.f32 %v501, %v776
        %v785 = vmul.f32 %v502, %v777
        %v786 = vmul.f32 %v503, %v778
        %v787 = vmul.f32 %v504, %v779
        %v788 = vadd.f32 %v780, 1e-10
        %v789 = vadd.f32 %v781, 1e-10
        %v790 = vadd.f32 %v782, 1e-10
        %v791 = vadd.f32 %v783, 1e-10
        %v792 = vadd.f32 %v784, 1e-10
        %v793 = vadd.f32 %v785, 1e-10
        %v794 = vadd.f32 %v786, 1e-10
        %v795 = vadd.f32 %v787, 1e-10
        %v796 = vmul.f32 %v788, %v788
        %v797 = vmul.f32 %v789, %v789
        %v798 = vmul.f32 %v790, %v790
        %v799 = vmul.f32 %v791, %v791
        %v800 = vmul.f32 %v792, %v792
        %v801 = vmul.f32 %v793, %v793
        %v802 = vmul.f32 %v794, %v794
        %v803 = vmul.f32 %v795, %v795
        %v804 = vmul.f32 %v796, %v796
        %v805 = vmul.f32 %v797, %v797
        %v806 = vmul.f32 %v798, %v798
        %v807 = vmul.f32 %v799, %v799
        %v808 = vmul.f32 %v800, %v800
        %v809 = vmul.f32 %v801, %v801
        %v810 = vmul.f32 %v802, %v802
        %v811 = vmul.f32 %v803, %v803
        %v812 = vadd.f32 %v804, %v805
        %v813 = vadd.f32 %v812, %v806
        %v814 = vadd.f32 %v813, %v807
        %v815 = vadd.f32 %v814, %v808
        %v816 = vadd.f32 %v815, %v809
        %v817 = vadd.f32 %v816, %v810
        %v818 = vadd.f32 %v817, %v811
        %v819 = vrot.slane %v818, 4
        %v820 = vadd.f32 %v818, %v819
        %v821 = vrot.slane %v820, 2
        %v822 = vadd.f32 %v820, %v821
        %v823 = vrot.slane %v822, 1
        %v824 = vadd.f32 %v822, %v823
        %825 = vst [vmem:[%s323] sm:$0x1] %v824
        %p826 = scmp.lt.s32.totalorder %s23, 2
        %s827 = scalar_select %p826, %s23, 2
        %p828 = scmp.lt.s32.totalorder %s22, 0
        %s829 = scalar_select %p828, %s22, 0
        %s830 = sadd.s32 %s829, %s827
        %s831 = scalar_lea.vmem %s6, %s830
        // Predicated region
        $region49: #{watson_loss.1} parent=43 // pred_check
          %p832 = pneg %p190
        $region50: #{watson_loss.1} parent=43 // pred_check_branch
          %834 = sbr.rel (%p832) target = $region52
        $region51: #{watson_loss.1} parent=43 // pred_region
          _
        $region52: #{watson_loss.1} parent=43 // pred_fallthru
          _
      $region44: #{watson_loss.1} parent=5 // pred_fallthru
        _
      %p835 = scmp.le.s32.totalorder 2, %s13
      // Predicated region
      $region53: #{watson_loss.1} parent=5 // pred_check
        %p836 = pneg %p835
      $region54: #{watson_loss.1} parent=5 // pred_check_branch
        %838 = sbr.rel (%p836) target = $region56
      $region55: #{watson_loss.1} parent=5 // pred_region
        %s839 = ssub.s32 %s13, 2
        // Predicated region
        $region57: #{watson_loss.1} parent=55 // pred_check
          %p840 = pneg %p196
        $region58: #{watson_loss.1} parent=55 // pred_check_branch
          %842 = sbr.rel (%p840) target = $region60
        $region59: #{watson_loss.1} parent=55 // pred_region
          %p843 = scmp.lt.s32.totalorder %s25, 2
          %s844 = scalar_select %p843, %s25, 2
          %p845 = scmp.lt.s32.totalorder %s24, 0
          %s846 = scalar_select %p845, %s24, 0
          %s847 = sadd.s32 %s846, %s844
          %s848 = scalar_lea.vmem %s6, %s847
        $region60: #{watson_loss.1} parent=55 // pred_fallthru
          _
      $region56: #{watson_loss.1} parent=5 // pred_fallthru
        _
    $region6: #{watson_loss.1} parent=1 // loop_footer
      %s17 = sadd.s32 1, %s13
    $region7: #{watson_loss.1} parent=1 // loop_footer_branch
      %12 = sbr.rel target = $region3
    $region8: #{watson_loss.1} parent=1 // loop_exit
      _
    %849 = vsyncpa [#allocation3], 1
    %s850 = scalar_lea.sflag [#allocation3], 1
    %851 = vsyncpa %s850, 1

</llo_original>
